<compile_context>
chip_gen: v7x
topology: tpu7x:2x2x1
jax: 0.10.0
libtpu: 0.0.40
codegen_flags: <defaults>
</compile_context>

<pallas_src>
import functools

import jax
import jax.numpy as jnp
from jax.experimental import pallas as pl
from jax.experimental.pallas import tpu as pltpu

LANES = 128
ACC_ROWS = 64                      # accumulator rows -> 8 independent vregs
TARGET_BLOCK_BYTES = 8 << 20       # ~8 MiB per input per pipeline buffer
SMALL_FAST_PATH_ELEMS = 64 * 1024  # below this, plain XLA reduce is faster


@functools.lru_cache(maxsize=1)
def _vmem_capacity_bytes():
    try:
        cap = getattr(pltpu.get_tpu_info(), "vmem_capacity_bytes", None)
        if cap:
            return int(cap)
    except Exception:
        pass
    return 64 << 20  # conservative: v7x per-TensorCore VMEM


def _mse_kernel(x_ref, t_ref, acc_ref, *, total_rows, need_mask):
    j = pl.program_id(1)

    @pl.when(j == 0)
    def _():
        acc_ref[...] = jnp.zeros_like(acc_ref)

    d = x_ref[...].astype(jnp.float32) - t_ref[...].astype(jnp.float32)
    if need_mask:
        # Logical (unclamped) block index; rows past the real data (partial
        # last block, or the split/overhang iterations whose index_map was
        # clamped) are zeroed before squaring.
        lb = pl.program_id(0) * pl.num_programs(1) + j
        row_ids = lb * x_ref.shape[0] + jax.lax.broadcasted_iota(
            jnp.int32, d.shape, 0)
        d = jnp.where(row_ids < total_rows, d, 0.0)

    # Collapse the block onto a (64, 128) accumulator: 8 independent vreg add
    # chains (fills the VALU slots) instead of one long serial chain.  The
    # single cross-lane reduce happens once, in the wrapper.
    acc_ref[...] += jnp.sum((d * d).reshape(-1, ACC_ROWS, LANES), axis=0)


def _mse_sum_pallas(x, target):
    """Sum of squared differences (f32 scalar), Pallas-tiled for large inputs."""
    assert x.shape == target.shape, "input and target must have the same shape"
    n_true = x.size

    # Small-input fast path: launch/grid fixed costs dominate; XLA's fused
    # elementwise + reduce is already optimal here.
    if n_true <= SMALL_FAST_PATH_ELEMS:
        d = x.astype(jnp.float32) - target.astype(jnp.float32)
        return jnp.sum(d * d)

    xf = x.reshape(-1)
    tf = target.reshape(-1)

    # Pad only to a lane (128) multiple, never to the full sublane granule;
    # the in-kernel row mask absorbs everything else.  (The <128-element pad
    # still costs one extra HBM pass for lane-unaligned sizes; aligned sizes —
    # the common case — are a free metadata reshape.)
    pad = (-n_true) % LANES
    if pad:
        xf = jnp.pad(xf, (0, pad))
        tf = jnp.pad(tf, (0, pad))
    rows = (n_true + pad) // LANES
    x2 = xf.reshape(rows, LANES)
    t2 = tf.reshape(rows, LANES)

    # ---- block sizing: byte budget, generation-aware VMEM cap -------------
    itemsize_x = jnp.dtype(x.dtype).itemsize
    itemsize_t = jnp.dtype(target.dtype).itemsize
    max_itemsize = max(itemsize_x, itemsize_t)
    vmem_cap = _vmem_capacity_bytes()
    per_input_budget = min(TARGET_BLOCK_BYTES, vmem_cap // 8)
    budget_rows = max(ACC_ROWS,
                      (per_input_budget // (LANES * max_itemsize))
                      // ACC_ROWS * ACC_ROWS)
    block_rows = min(budget_rows, (rows // ACC_ROWS) * ACC_ROWS)
    nblocks = pl.cdiv(rows, block_rows)

    # Ensure mid-size tensors still split across v7x's two TensorCores: if a
    # single block would cover everything, halve it so each core gets work.
    if nblocks == 1 and rows >= 8 * ACC_ROWS:
        block_rows = max(ACC_ROWS,
                         -(-pl.cdiv(rows, 2) // ACC_ROWS) * ACC_ROWS)
        nblocks = pl.cdiv(rows, block_rows)

    n_split = 2 if nblocks >= 2 else 1
    bpc = pl.cdiv(nblocks, n_split)            # blocks per split
    need_mask = (nblocks * block_rows != rows) or (n_split * bpc != nblocks)

    def in_index_map(i, j):
        # Clamp so the DMA of overhang iterations stays in bounds; the
        # in-kernel mask zeroes their contribution.
        return (jnp.minimum(i * bpc + j, nblocks - 1), 0)

    kernel = functools.partial(_mse_kernel, total_rows=rows,
                               need_mask=need_mask)

    bytes_per_row = LANES * (itemsize_x + itemsize_t)
    out_bytes = n_split * ACC_ROWS * LANES * 4
    # 2 pipeline buffers per input + resident accumulator + compiler headroom.
    vmem_limit = max(16 << 20,
                     int(2 * block_rows * bytes_per_row + 2 * out_bytes
                         + (4 << 20)))

    cost = pl.CostEstimate(
        flops=3 * rows * LANES,
        transcendentals=0,
        bytes_accessed=rows * bytes_per_row + out_bytes,
    )

    partials = pl.pallas_call(
        kernel,
        out_shape=jax.ShapeDtypeStruct((n_split * ACC_ROWS, LANES),
                                       jnp.float32),
        grid_spec=pltpu.PrefetchScalarGridSpec(
            num_scalar_prefetch=0,
            grid=(n_split, bpc),
            in_specs=[
                pl.BlockSpec((block_rows, LANES), in_index_map),
                pl.BlockSpec((block_rows, LANES), in_index_map),
            ],
            # Output block doubles as the per-split accumulator: its index is
            # constant along the reduction axis, so it stays resident in VMEM.
            out_specs=pl.BlockSpec((ACC_ROWS, LANES), lambda i, j: (i, 0)),
        ),
        compiler_params=pltpu.CompilerParams(
            dimension_semantics=("parallel", "arbitrary"),
            vmem_limit_bytes=vmem_limit),
        cost_estimate=cost,
    )(x2, t2)

    return jnp.sum(partials)


@jax.custom_vjp
def mse_loss(x, target):
    return _mse_sum_pallas(x, target) / x.size


def _mse_loss_fwd(x, target):
    return _mse_sum_pallas(x, target) / x.size, (x, target)


def _mse_loss_bwd(res, g):
    x, target = res
    scale = g * (2.0 / x.size)
    d = (x.astype(jnp.float32) - target.astype(jnp.float32)) * scale
    return d.astype(x.dtype), (-d).astype(target.dtype)


mse_loss.defvjp(_mse_loss_fwd, _mse_loss_bwd)


class ContentLoss:
    """JAX/Pallas equivalent of the PyTorch ContentLoss module."""

    def __init__(self, target):
        self.target = jax.lax.stop_gradient(target)  # .detach() equivalent
        self.loss = None

    def __call__(self, x):
        # TODO(synk): the self.loss attribute side-effect (like the PyTorch
        # original) does not compose with jit/scan tracing; fine eagerly.
        self.loss = mse_loss(x, self.target)
        return x  # identity pass-through, as in the PyTorch forward


if __name__ == "__main__":
    key = jax.random.PRNGKey(0)
    k1, k2, k3, k4, k5, k6 = jax.random.split(key, 6)

    # 1) Module semantics at the spec's small shape (XLA fast path).
    x = jax.random.normal(k1, (2, 4, 16, 16), dtype=jnp.float32)
    target = jax.random.normal(k2, (2, 4, 16, 16), dtype=jnp.float32)
    module = ContentLoss(target)
    out = jax.block_until_ready(module(x))
    loss = jax.block_until_ready(module.loss)
    ref = jnp.mean((x - target) ** 2)
    assert out.shape == x.shape and out.dtype == x.dtype
    assert jnp.allclose(out, x)
    assert jnp.allclose(loss, ref, rtol=1e-5, atol=1e-6), (loss, ref)

    # 2) Pallas path: lane-aligned f32 tensor (exercises the kernel + split).
    xa = jax.random.normal(k3, (2, 8, 96, 96), dtype=jnp.float32)
    ta = jax.random.normal(k4, (2, 8, 96, 96), dtype=jnp.float32)
    la = jax.block_until_ready(mse_loss(xa, ta))
    refa = jnp.mean((xa - ta) ** 2)
    assert jnp.allclose(la, refa, rtol=1e-5, atol=1e-6), (la, refa)

    # 3) Pallas path: lane-unaligned element count, bf16 (tail + mask path).
    xb = jax.random.normal(k5, (3, 7, 107, 41), dtype=jnp.bfloat16)
    tb = jax.random.normal(k6, (3, 7, 107, 41), dtype=jnp.bfloat16)
    lb = jax.block_until_ready(mse_loss(xb, tb))
    refb = jnp.mean((xb.astype(jnp.float32) - tb.astype(jnp.float32)) ** 2)
    assert jnp.allclose(lb, refb, rtol=1e-4, atol=1e-5), (lb, refb)

    print("KERNEL_OK")
</pallas_src>

<mosaic_0001>
module attributes {stable_mosaic.version = 11 : i64} {
  func.func @_mse_kernel(%arg0: i32, %arg1: i32, %arg2: memref<576x128xf32, #tpu.memory_space<vmem>>, %arg3: memref<576x128xf32, #tpu.memory_space<vmem>>, %arg4: memref<64x128xf32, #tpu.memory_space<vmem>>) attributes {dimension_semantics = [#tpu.dimension_semantics<parallel>, #tpu.dimension_semantics<arbitrary>], iteration_bounds = array<i64: 2, 1>, scalar_prefetch = 0 : i64, scratch_operands = 0 : i64, tpu.core_type = #tpu.core_type<tc>, window_params = [{transform_indices = @transform_0, window_bounds = array<i64: 576, 128>}, {transform_indices = @transform_1, window_bounds = array<i64: 576, 128>}, {transform_indices = @transform_2, window_bounds = array<i64: 64, 128>}]} {
    %c0_i32 = arith.constant 0 : i32
    %0 = arith.cmpi eq, %arg1, %c0_i32 : i32
    %1 = arith.extui %0 : i1 to i32
    %c0_i32_0 = arith.constant 0 : i32
    %2 = arith.cmpi ne, %1, %c0_i32_0 : i32
    scf.if %2 {
      %cst_8 = arith.constant 0.000000e+00 : f32
      %12 = vector.broadcast %cst_8 : f32 to vector<64x128xf32>
      %c0_9 = arith.constant 0 : index
      %c0_10 = arith.constant 0 : index
      %13 = vector.load %arg4[%c0_9, %c0_10] : memref<64x128xf32, #tpu.memory_space<vmem>>, vector<64x128xf32>
      tpu.vector_store %arg4[%c0_9, %c0_10], %12 {strides = array<i32>} : memref<64x128xf32, #tpu.memory_space<vmem>>, vector<64x128xf32>,
    } else {
    }
    %c0 = arith.constant 0 : index
    %c0_1 = arith.constant 0 : index
    %3 = vector.load %arg2[%c0, %c0_1] : memref<576x128xf32, #tpu.memory_space<vmem>>, vector<576x128xf32>
    %c0_2 = arith.constant 0 : index
    %c0_3 = arith.constant 0 : index
    %4 = vector.load %arg3[%c0_2, %c0_3] : memref<576x128xf32, #tpu.memory_space<vmem>>, vector<576x128xf32>
    %5 = arith.subf %3, %4 : vector<576x128xf32>
    %c0_4 = arith.constant 0 : index
    %c0_5 = arith.constant 0 : index
    %6 = vector.load %arg4[%c0_4, %c0_5] : memref<64x128xf32, #tpu.memory_space<vmem>>, vector<64x128xf32>
    %7 = arith.mulf %5, %5 : vector<576x128xf32>
    %8 = vector.shape_cast %7 : vector<576x128xf32> to vector<9x64x128xf32>
    %cst = arith.constant dense<0.000000e+00> : vector<64x128xf32>
    %9 = vector.multi_reduction <add>, %8, %cst [0] : vector<9x64x128xf32> to vector<64x128xf32>
    %10 = arith.addf %6, %9 : vector<64x128xf32>
    %c0_6 = arith.constant 0 : index
    %c0_7 = arith.constant 0 : index
    %11 = vector.load %arg4[%c0_6, %c0_7] : memref<64x128xf32, #tpu.memory_space<vmem>>, vector<64x128xf32>
    tpu.vector_store %arg4[%c0_6, %c0_7], %10 {strides = array<i32>} : memref<64x128xf32, #tpu.memory_space<vmem>>, vector<64x128xf32>,
    return
  }
  func.func @transform_0(%arg0: i32, %arg1: i32) -> (i32, i32) {
    %c1_i32 = arith.constant 1 : i32
    %0 = arith.muli %arg0, %c1_i32 : i32
    %1 = arith.addi %0, %arg1 : i32
    %c1_i32_0 = arith.constant 1 : i32
    %2 = arith.minsi %1, %c1_i32_0 : i32
    %c0_i32 = arith.constant 0 : i32
    %c0_i32_1 = arith.constant 0 : i32
    return %2, %c0_i32 : i32, i32
  }
  func.func @transform_1(%arg0: i32, %arg1: i32) -> (i32, i32) {
    %c1_i32 = arith.constant 1 : i32
    %0 = arith.muli %arg0, %c1_i32 : i32
    %1 = arith.addi %0, %arg1 : i32
    %c1_i32_0 = arith.constant 1 : i32
    %2 = arith.minsi %1, %c1_i32_0 : i32
    %c0_i32 = arith.constant 0 : i32
    %c0_i32_1 = arith.constant 0 : i32
    return %2, %c0_i32 : i32, i32
  }
  func.func @transform_2(%arg0: i32, %arg1: i32) -> (i32, i32) {
    %c0_i32 = arith.constant 0 : i32
    %c0_i32_0 = arith.constant 0 : i32
    return %arg0, %c0_i32 : i32, i32
  }
}

</mosaic_0001>

<llo_original>
// kernel: tpu_custom_call.1
$region0: #{tpu_custom_call.1}
  #allocation0 [shape = 'u32[]', space=smem, size = 0x4, offset = 0x4, fixed_abs, tag = 'smem constant byte address 0x4 - core index']
  #allocation1 [shape = 'u32[144,128]{1,0:T(1,128)}', space=vmem, size = 0x12000, scoped, tag = 'internal scratch']
  %s0 = inlined_call_operand.hbm [shape: f32[1152,128], index: 0, kind: input, shape index: {}]
  %s1 = inlined_call_operand.hbm [shape: f32[1152,128], index: 1, kind: input, shape index: {}]
  %s2 = inlined_call_operand.hbm [shape: f32[128,128], index: 2, kind: output, shape index: {}]
  %s3 = sld [smem:[#allocation0]]
  $region53: #{tpu_custom_call.1} parent=0
    _
  %s5 = ssub.s32 1, %s3
  %s6 = scalar_select 0, %s5, %s3
  $region1: #{tpu_custom_call.1} parent=0
    #allocation2 [shape = 'u8[589824]{0}', space=vmem, size = 0x90000, scoped, tag = 'input window, operand 0']
    #allocation3 [shape = 's32[2]{0}', space=sflag, size = 0x8, scoped, tag = 'scoped memory for tpu_custom_call.1']
    #allocation4 [shape = 's32[2]{0}', space=sflag, size = 0x8, scoped, tag = 'scoped memory for tpu_custom_call.1']
    #allocation5 [shape = 'u8[589824]{0}', space=vmem, size = 0x90000, scoped, tag = 'input window, operand 1']
    #allocation6 [shape = 's32[2]{0}', space=sflag, size = 0x8, scoped, tag = 'scoped memory for tpu_custom_call.1']
    #allocation7 [shape = 'u8[65536]{0}', space=vmem, size = 0x10000, scoped, tag = 'output window, operand 0']
    %7 = vsyncpa [#allocation3], 0
    %s8 = scalar_lea.sflag [#allocation3], 1
    %9 = vsyncpa %s8, 0
    %10 = vsyncpa [#allocation6], 0
    %s11 = scalar_lea.sflag [#allocation6], 1
    %12 = vsyncpa %s11, 0
    %13 = vsyncpa [#allocation4], 0
    %s14 = scalar_lea.sflag [#allocation4], 1
    %15 = vsyncpa %s14, 0
    loop: start=0, step=1, limit=4
    $region2: #{tpu_custom_call.1} parent=1 // loop_pre_header
      _
    $region3: #{tpu_custom_call.1} parent=1 // loop_header
      %s17 = sphi 0, %s21
      %p18 = scmp.ge.s32.totalorder %s17, 4
      %s24 = sphi 0, %s36
      %s25 = sphi 0, %s32
      %s26 = sphi 0, %s24
      %s27 = sphi 0, %s25
      %s28 = sphi 0, %s26
      %s29 = sphi 0, %s27
      %s45 = sphi 0, %s47
      %s48 = sphi 0, %s45
      %s49 = sphi 0, %s48
      %s65 = sphi 0, %s49
      %s77 = sphi 0, %s79
      %s80 = sphi 0, %s77
      %s81 = sphi 0, %s80
      %s97 = sphi 0, %s81
      %s103 = sphi 0, %s105
      %s106 = sphi 0, %s103
      %s107 = sphi 0, %s106
      %s123 = sphi 0, %s107
    $region4: #{tpu_custom_call.1} parent=1 // loop_header_branch
      %20 = sbr.rel (%p18) target = $region8
    $region5: #{tpu_custom_call.1} parent=1 // loop_body
      %s22 = ssub.s32 %s17, 1
      %s23 = ssub.s32 %s17, 2
      %s30 = sadd.s32 1, %s25
      %p31 = scmp.ge.s32.totalorder %s30, 1
      %s32 = scalar_select %p31, 0, %s30
      %s33 = sadd.s32 1, %s24
      %s34 = scalar_select %p31, %s33, %s24
      %p35 = scmp.ge.s32.totalorder %s34, 2
      %s36 = scalar_select %p35, 0, %s34
      %s37 = sadd.s32 %s24, %s25
      %p38 = scmp.lt.s32.totalorder %s37, 1
      %s39 = scalar_select %p38, %s37, 1
      %s40 = sadd.s32 %s36, %s32
      %p41 = scmp.lt.s32.totalorder %s40, 1
      %s42 = scalar_select %p41, %s40, 1
      %s43 = ssub.s32 %s39, %s42
      %p44 = scmp.eq.s32.totalorder %s43, 0
      %s46 = sadd.s32 %s45, 1
      %s47 = scalar_select %p44, %s45, %s46
      %p50 = pneg %p44
      %p51 = scmp.eq.s32.totalorder %s17, 1
      %p52 = por %p50, %p51
      %p53 = scmp.ne.s32.totalorder %s45, %s48
      %p54 = scmp.eq.s32.totalorder %s17, 0
      %p55 = por %p53, %p54
      %p56 = scmp.ne.s32.totalorder %s45, %s48
      %p57 = scmp.eq.s32.totalorder %s22, 1
      %p58 = por %p56, %p57
      %p59 = scmp.ne.s32.totalorder %s48, %s49
      %p60 = scmp.eq.s32.totalorder %s22, 0
      %p61 = por %p59, %p60
      %p62 = scmp.ne.s32.totalorder %s48, %s49
      %p63 = scmp.eq.s32.totalorder %s23, 1
      %p64 = por %p62, %p63
      %p66 = scmp.ne.s32.totalorder %s49, %s65
      %p67 = scmp.eq.s32.totalorder %s23, 0
      %p68 = por %p66, %p67
      %s69 = sadd.s32 %s24, %s25
      %p70 = scmp.lt.s32.totalorder %s69, 1
      %s71 = scalar_select %p70, %s69, 1
      %s72 = sadd.s32 %s36, %s32
      %p73 = scmp.lt.s32.totalorder %s72, 1
      %s74 = scalar_select %p73, %s72, 1
      %s75 = ssub.s32 %s71, %s74
      %p76 = scmp.eq.s32.totalorder %s75, 0
      %s78 = sadd.s32 %s77, 1
      %s79 = scalar_select %p76, %s77, %s78
      %p82 = pneg %p76
      %p83 = scmp.eq.s32.totalorder %s17, 1
      %p84 = por %p82, %p83
      %p85 = scmp.ne.s32.totalorder %s77, %s80
      %p86 = scmp.eq.s32.totalorder %s17, 0
      %p87 = por %p85, %p86
      %p88 = scmp.ne.s32.totalorder %s77, %s80
      %p89 = scmp.eq.s32.totalorder %s22, 1
      %p90 = por %p88, %p89
      %p91 = scmp.ne.s32.totalorder %s80, %s81
      %p92 = scmp.eq.s32.totalorder %s22, 0
      %p93 = por %p91, %p92
      %p94 = scmp.ne.s32.totalorder %s80, %s81
      %p95 = scmp.eq.s32.totalorder %s23, 1
      %p96 = por %p94, %p95
      %p98 = scmp.ne.s32.totalorder %s81, %s97
      %p99 = scmp.eq.s32.totalorder %s23, 0
      %p100 = por %p98, %p99
      %s101 = ssub.s32 %s24, %s36
      %p102 = scmp.eq.s32.totalorder %s101, 0
      %s104 = sadd.s32 %s103, 1
      %s105 = scalar_select %p102, %s103, %s104
      %p108 = pneg %p102
      %p109 = scmp.eq.s32.totalorder %s17, 1
      %p110 = por %p108, %p109
      %p111 = scmp.ne.s32.totalorder %s103, %s106
      %p112 = scmp.eq.s32.totalorder %s17, 0
      %p113 = por %p111, %p112
      %p114 = scmp.ne.s32.totalorder %s103, %s106
      %p115 = scmp.eq.s32.totalorder %s22, 1
      %p116 = por %p114, %p115
      %p117 = scmp.ne.s32.totalorder %s106, %s107
      %p118 = scmp.eq.s32.totalorder %s22, 0
      %p119 = por %p117, %p118
      %p120 = scmp.ne.s32.totalorder %s106, %s107
      %p121 = scmp.eq.s32.totalorder %s23, 1
      %p122 = por %p120, %p121
      %p124 = scmp.ne.s32.totalorder %s107, %s123
      %p125 = scmp.eq.s32.totalorder %s23, 0
      %p126 = por %p124, %p125
      %p127 = scmp.le.s32.totalorder 1, %s17
      %p128 = scmp.lt.s32.totalorder %s17, 3
      %p129 = pnand %p127, %p128
      %p130 = pneg %p129
      // Predicated region
      $region9: #{tpu_custom_call.1} parent=5 // pred_check
        _
      $region10: #{tpu_custom_call.1} parent=5 // pred_check_branch
        %132 = sbr.rel (%p129) target = $region12
      $region11: #{tpu_custom_call.1} parent=5 // pred_region
        %s133 = ssub.s32 %s17, 1
      $region12: #{tpu_custom_call.1} parent=5 // pred_fallthru
        _
      %p134 = scmp.lt.s32.totalorder %s17, 2
      // Predicated region
      $region13: #{tpu_custom_call.1} parent=5 // pred_check
        %p135 = pneg %p134
      $region14: #{tpu_custom_call.1} parent=5 // pred_check_branch
        %137 = sbr.rel (%p135) target = $region16
      $region15: #{tpu_custom_call.1} parent=5 // pred_region
        // Predicated region
        $region17: #{tpu_custom_call.1} parent=15 // pred_check
          %p138 = pneg %p55
        $region18: #{tpu_custom_call.1} parent=15 // pred_check_branch
          %140 = sbr.rel (%p138) target = $region20
        $region19: #{tpu_custom_call.1} parent=15 // pred_region
          %s141 = sand.u32 %s45, 1
          %s142 = scalar_lea.sflag [#allocation3], %s141
          %s143 = sand.u32 %s45, 1
          %s144 = smul.addr %s143, 576
          %s145 = scalar_lea.vmem [#allocation2], %s144
          %s146 = sadd.s32 %s24, %s25
          %p147 = scmp.lt.s32.totalorder %s146, 1
          %s148 = scalar_select %p147, %s146, 1
          %s149 = smul.u32 72, %s148
          %s151 = ssub.s32 9216, 9216
          %152 = vsyncadd %s142, %s151
          %s153 = smul.addr %s149, 128
          %s154 = scalar_lea.hbm %s0, %s153
          %s155 = sshll.u32 %s145, 4
          %s156 = int_to_ptr.vmem [resolvable:$true] %s155
          %161 = dma.hbm_to_vmem [thread:$0]  %s154, 9216, %s156, %s142, 128, 128, 8
        $region20: #{tpu_custom_call.1} parent=15 // pred_fallthru
          _
        // Predicated region
        $region21: #{tpu_custom_call.1} parent=15 // pred_check
          %p162 = pneg %p87
        $region22: #{tpu_custom_call.1} parent=15 // pred_check_branch
          %164 = sbr.rel (%p162) target = $region24
        $region23: #{tpu_custom_call.1} parent=15 // pred_region
          %s165 = sand.u32 %s77, 1
          %s166 = scalar_lea.sflag [#allocation6], %s165
          %s167 = sand.u32 %s77, 1
          %s168 = smul.addr %s167, 576
          %s169 = scalar_lea.vmem [#allocation5], %s168
          %s170 = sadd.s32 %s24, %s25
          %p171 = scmp.lt.s32.totalorder %s170, 1
          %s172 = scalar_select %p171, %s170, 1
          %s173 = smul.u32 72, %s172
          %s175 = ssub.s32 9216, 9216
          %176 = vsyncadd %s166, %s175
          %s177 = smul.addr %s173, 128
          %s178 = scalar_lea.hbm %s1, %s177
          %s179 = sshll.u32 %s169, 4
          %s180 = int_to_ptr.vmem [resolvable:$true] %s179
          %185 = dma.hbm_to_vmem [thread:$0]  %s178, 9216, %s180, %s166, 128, 128, 8
        $region24: #{tpu_custom_call.1} parent=15 // pred_fallthru
          _
      $region16: #{tpu_custom_call.1} parent=5 // pred_fallthru
        _
      %p186 = scmp.le.s32.totalorder 1, %s17
      %p187 = scmp.lt.s32.totalorder %s17, 3
      %p188 = pnand %p186, %p187
      %p189 = pneg %p188
      // Predicated region
      $region25: #{tpu_custom_call.1} parent=5 // pred_check
        _
      $region26: #{tpu_custom_call.1} parent=5 // pred_check_branch
        %191 = sbr.rel (%p188) target = $region28
      $region27: #{tpu_custom_call.1} parent=5 // pred_region
        %s192 = ssub.s32 %s17, 1
        %s193 = sand.u32 %s48, 1
        %s194 = scalar_lea.sflag [#allocation3], %s193
        %s195 = sand.u32 %s48, 1
        %s196 = smul.addr %s195, 576
        %s197 = scalar_lea.vmem [#allocation2], %s196
        // Predicated region
        $region29: #{tpu_custom_call.1} parent=27 // pred_check
          %p198 = pneg %p61
        $region30: #{tpu_custom_call.1} parent=27 // pred_check_branch
          %200 = sbr.rel (%p198) target = $region32
        $region31: #{tpu_custom_call.1} parent=27 // pred_region
          %201 = dma.done %s194, 9216
        $region32: #{tpu_custom_call.1} parent=27 // pred_fallthru
          _
        %s202 = sand.u32 %s80, 1
        %s203 = scalar_lea.sflag [#allocation6], %s202
        %s204 = sand.u32 %s80, 1
        %s205 = smul.addr %s204, 576
        %s206 = scalar_lea.vmem [#allocation5], %s205
        // Predicated region
        $region33: #{tpu_custom_call.1} parent=27 // pred_check
          %p207 = pneg %p93
        $region34: #{tpu_custom_call.1} parent=27 // pred_check_branch
          %209 = sbr.rel (%p207) target = $region36
        $region35: #{tpu_custom_call.1} parent=27 // pred_region
          %210 = dma.done %s203, 9216
        $region36: #{tpu_custom_call.1} parent=27 // pred_fallthru
          _
        %s211 = sand.u32 %s48, 1
        %s212 = scalar_lea.sflag [#allocation3], %s211
        %s213 = sand.u32 %s48, 1
        %s214 = smul.addr %s213, 576
        %s215 = scalar_lea.vmem [#allocation2], %s214
        %p216 = pneg %p61
        %p217 = pneg %p58
        %s218 = sand.u32 %s80, 1
        %s219 = scalar_lea.sflag [#allocation6], %s218
        %s220 = sand.u32 %s80, 1
        %s221 = smul.addr %s220, 576
        %s222 = scalar_lea.vmem [#allocation5], %s221
        %p223 = pneg %p93
        %p224 = pneg %p90
        %p225 = pneg %p119
        %p226 = pneg %p116
        %s227 = sand.u32 %s106, 1
        %s228 = scalar_lea.sflag [#allocation4], %s227
        %s229 = sand.u32 %s106, 1
        %s230 = smul.addr %s229, 64
        %s231 = scalar_lea.vmem [#allocation7], %s230
        %s232 = sadd.s32 %s26, %s27
        %p233 = scmp.lt.s32.totalorder %s232, 1
        %s234 = scalar_select %p233, %s232, 1
        %s235 = smul.u32 72, %s234
        %s236 = sadd.s32 %s26, %s27
        %p237 = scmp.lt.s32.totalorder %s236, 1
        %s238 = scalar_select %p237, %s236, 1
        %s239 = smul.u32 72, %s238
        %s240 = smul.u32 8, %s26
        %p241 = scmp.eq.s32.totalorder %s27, 0
        // Predicated region
        $region37: #{tpu_custom_call.1} parent=27 // pred_check
          %p242 = pneg %p241
        $region38: #{tpu_custom_call.1} parent=27 // pred_check_branch
          %244 = sbr.rel (%p242) target = $region40
        $region39: #{tpu_custom_call.1} parent=27 // pred_region
          %245 = vst [vmem:[%s231] sm:$0xff] 0.0
          %246 = vst [vmem:[%s231 + $0x8] sm:$0xff] 0.0
          %247 = vst [vmem:[%s231 + $0x10] sm:$0xff] 0.0
          %248 = vst [vmem:[%s231 + $0x18] sm:$0xff] 0.0
          %249 = vst [vmem:[%s231 + $0x20] sm:$0xff] 0.0
          %250 = vst [vmem:[%s231 + $0x28] sm:$0xff] 0.0
          %251 = vst [vmem:[%s231 + $0x30] sm:$0xff] 0.0
          %252 = vst [vmem:[%s231 + $0x38] sm:$0xff] 0.0
        $region40: #{tpu_custom_call.1} parent=27 // pred_fallthru
          _
        %v253 = vld [vmem:[%s197] sm:$0xff]
        %v254 = vld [vmem:[%s197 + $0x8] sm:$0xff]
        %v255 = vld [vmem:[%s197 + $0x10] sm:$0xff]
        %v256 = vld [vmem:[%s197 + $0x18] sm:$0xff]
        %v257 = vld [vmem:[%s197 + $0x20] sm:$0xff]
        %v258 = vld [vmem:[%s197 + $0x28] sm:$0xff]
        %v259 = vld [vmem:[%s197 + $0x30] sm:$0xff]
        %v260 = vld [vmem:[%s197 + $0x38] sm:$0xff]
        %v261 = vld [vmem:[%s197 + $0x40] sm:$0xff]
        %v262 = vld [vmem:[%s197 + $0x48] sm:$0xff]
        %v263 = vld [vmem:[%s197 + $0x50] sm:$0xff]
        %v264 = vld [vmem:[%s197 + $0x58] sm:$0xff]
        %v265 = vld [vmem:[%s197 + $0x60] sm:$0xff]
        %v266 = vld [vmem:[%s197 + $0x68] sm:$0xff]
        %v267 = vld [vmem:[%s197 + $0x70] sm:$0xff]
        %v268 = vld [vmem:[%s197 + $0x78] sm:$0xff]
        %v269 = vld [vmem:[%s197 + $0x80] sm:$0xff]
        %v270 = vld [vmem:[%s197 + $0x88] sm:$0xff]
        %v271 = vld [vmem:[%s197 + $0x90] sm:$0xff]
        %v272 = vld [vmem:[%s197 + $0x98] sm:$0xff]
        %v273 = vld [vmem:[%s197 + $0xa0] sm:$0xff]
        %v274 = vld [vmem:[%s197 + $0xa8] sm:$0xff]
        %v275 = vld [vmem:[%s197 + $0xb0] sm:$0xff]
        %v276 = vld [vmem:[%s197 + $0xb8] sm:$0xff]
        %v277 = vld [vmem:[%s197 + $0xc0] sm:$0xff]
        %v278 = vld [vmem:[%s197 + $0xc8] sm:$0xff]
        %v279 = vld [vmem:[%s197 + $0xd0] sm:$0xff]
        %v280 = vld [vmem:[%s197 + $0xd8] sm:$0xff]
        %v281 = vld [vmem:[%s197 + $0xe0] sm:$0xff]
        %v282 = vld [vmem:[%s197 + $0xe8] sm:$0xff]
        %v283 = vld [vmem:[%s197 + $0xf0] sm:$0xff]
        %v284 = vld [vmem:[%s197 + $0xf8] sm:$0xff]
        %v285 = vld [vmem:[%s197 + $0x100] sm:$0xff]
        %v286 = vld [vmem:[%s197 + $0x108] sm:$0xff]
        %v287 = vld [vmem:[%s197 + $0x110] sm:$0xff]
        %v288 = vld [vmem:[%s197 + $0x118] sm:$0xff]
        %v289 = vld [vmem:[%s197 + $0x120] sm:$0xff]
        %v290 = vld [vmem:[%s197 + $0x128] sm:$0xff]
        %v291 = vld [vmem:[%s197 + $0x130] sm:$0xff]
        %v292 = vld [vmem:[%s197 + $0x138] sm:$0xff]
        %v293 = vld [vmem:[%s197 + $0x140] sm:$0xff]
        %v294 = vld [vmem:[%s197 + $0x148] sm:$0xff]
        %v295 = vld [vmem:[%s197 + $0x150] sm:$0xff]
        %v296 = vld [vmem:[%s197 + $0x158] sm:$0xff]
        %v297 = vld [vmem:[%s197 + $0x160] sm:$0xff]
        %v298 = vld [vmem:[%s197 + $0x168] sm:$0xff]
        %v299 = vld [vmem:[%s197 + $0x170] sm:$0xff]
        %v300 = vld [vmem:[%s197 + $0x178] sm:$0xff]
        %v301 = vld [vmem:[%s197 + $0x180] sm:$0xff]
        %v302 = vld [vmem:[%s197 + $0x188] sm:$0xff]
        %v303 = vld [vmem:[%s197 + $0x190] sm:$0xff]
        %v304 = vld [vmem:[%s197 + $0x198] sm:$0xff]
        %v305 = vld [vmem:[%s197 + $0x1a0] sm:$0xff]
        %v306 = vld [vmem:[%s197 + $0x1a8] sm:$0xff]
        %v307 = vld [vmem:[%s197 + $0x1b0] sm:$0xff]
        %v308 = vld [vmem:[%s197 + $0x1b8] sm:$0xff]
        %v309 = vld [vmem:[%s197 + $0x1c0] sm:$0xff]
        %v310 = vld [vmem:[%s197 + $0x1c8] sm:$0xff]
        %v311 = vld [vmem:[%s197 + $0x1d0] sm:$0xff]
        %v312 = vld [vmem:[%s197 + $0x1d8] sm:$0xff]
        %v313 = vld [vmem:[%s197 + $0x1e0] sm:$0xff]
        %v314 = vld [vmem:[%s197 + $0x1e8] sm:$0xff]
        %v315 = vld [vmem:[%s197 + $0x1f0] sm:$0xff]
        %v316 = vld [vmem:[%s197 + $0x1f8] sm:$0xff]
        %v317 = vld [vmem:[%s197 + $0x200] sm:$0xff]
        %v318 = vld [vmem:[%s197 + $0x208] sm:$0xff]
        %v319 = vld [vmem:[%s197 + $0x210] sm:$0xff]
        %v320 = vld [vmem:[%s197 + $0x218] sm:$0xff]
        %v321 = vld [vmem:[%s197 + $0x220] sm:$0xff]
        %v322 = vld [vmem:[%s197 + $0x228] sm:$0xff]
        %v323 = vld [vmem:[%s197 + $0x230] sm:$0xff]
        %v324 = vld [vmem:[%s197 + $0x238] sm:$0xff]
        %v325 = vld [vmem:[%s206] sm:$0xff]
        %v326 = vld [vmem:[%s206 + $0x8] sm:$0xff]
        %v327 = vld [vmem:[%s206 + $0x10] sm:$0xff]
        %v328 = vld [vmem:[%s206 + $0x18] sm:$0xff]
        %v329 = vld [vmem:[%s206 + $0x20] sm:$0xff]
        %v330 = vld [vmem:[%s206 + $0x28] sm:$0xff]
        %v331 = vld [vmem:[%s206 + $0x30] sm:$0xff]
        %v332 = vld [vmem:[%s206 + $0x38] sm:$0xff]
        %v333 = vld [vmem:[%s206 + $0x40] sm:$0xff]
        %v334 = vld [vmem:[%s206 + $0x48] sm:$0xff]
        %v335 = vld [vmem:[%s206 + $0x50] sm:$0xff]
        %v336 = vld [vmem:[%s206 + $0x58] sm:$0xff]
        %v337 = vld [vmem:[%s206 + $0x60] sm:$0xff]
        %v338 = vld [vmem:[%s206 + $0x68] sm:$0xff]
        %v339 = vld [vmem:[%s206 + $0x70] sm:$0xff]
        %v340 = vld [vmem:[%s206 + $0x78] sm:$0xff]
        %v341 = vld [vmem:[%s206 + $0x80] sm:$0xff]
        %v342 = vld [vmem:[%s206 + $0x88] sm:$0xff]
        %v343 = vld [vmem:[%s206 + $0x90] sm:$0xff]
        %v344 = vld [vmem:[%s206 + $0x98] sm:$0xff]
        %v345 = vld [vmem:[%s206 + $0xa0] sm:$0xff]
        %v346 = vld [vmem:[%s206 + $0xa8] sm:$0xff]
        %v347 = vld [vmem:[%s206 + $0xb0] sm:$0xff]
        %v348 = vld [vmem:[%s206 + $0xb8] sm:$0xff]
        %v349 = vld [vmem:[%s206 + $0xc0] sm:$0xff]
        %v350 = vld [vmem:[%s206 + $0xc8] sm:$0xff]
        %v351 = vld [vmem:[%s206 + $0xd0] sm:$0xff]
        %v352 = vld [vmem:[%s206 + $0xd8] sm:$0xff]
        %v353 = vld [vmem:[%s206 + $0xe0] sm:$0xff]
        %v354 = vld [vmem:[%s206 + $0xe8] sm:$0xff]
        %v355 = vld [vmem:[%s206 + $0xf0] sm:$0xff]
        %v356 = vld [vmem:[%s206 + $0xf8] sm:$0xff]
        %v357 = vld [vmem:[%s206 + $0x100] sm:$0xff]
        %v358 = vld [vmem:[%s206 + $0x108] sm:$0xff]
        %v359 = vld [vmem:[%s206 + $0x110] sm:$0xff]
        %v360 = vld [vmem:[%s206 + $0x118] sm:$0xff]
        %v361 = vld [vmem:[%s206 + $0x120] sm:$0xff]
        %v362 = vld [vmem:[%s206 + $0x128] sm:$0xff]
        %v363 = vld [vmem:[%s206 + $0x130] sm:$0xff]
        %v364 = vld [vmem:[%s206 + $0x138] sm:$0xff]
        %v365 = vld [vmem:[%s206 + $0x140] sm:$0xff]
        %v366 = vld [vmem:[%s206 + $0x148] sm:$0xff]
        %v367 = vld [vmem:[%s206 + $0x150] sm:$0xff]
        %v368 = vld [vmem:[%s206 + $0x158] sm:$0xff]
        %v369 = vld [vmem:[%s206 + $0x160] sm:$0xff]
        %v370 = vld [vmem:[%s206 + $0x168] sm:$0xff]
        %v371 = vld [vmem:[%s206 + $0x170] sm:$0xff]
        %v372 = vld [vmem:[%s206 + $0x178] sm:$0xff]
        %v373 = vld [vmem:[%s206 + $0x180] sm:$0xff]
        %v374 = vld [vmem:[%s206 + $0x188] sm:$0xff]
        %v375 = vld [vmem:[%s206 + $0x190] sm:$0xff]
        %v376 = vld [vmem:[%s206 + $0x198] sm:$0xff]
        %v377 = vld [vmem:[%s206 + $0x1a0] sm:$0xff]
        %v378 = vld [vmem:[%s206 + $0x1a8] sm:$0xff]
        %v379 = vld [vmem:[%s206 + $0x1b0] sm:$0xff]
        %v380 = vld [vmem:[%s206 + $0x1b8] sm:$0xff]
        %v381 = vld [vmem:[%s206 + $0x1c0] sm:$0xff]
        %v382 = vld [vmem:[%s206 + $0x1c8] sm:$0xff]
        %v383 = vld [vmem:[%s206 + $0x1d0] sm:$0xff]
        %v384 = vld [vmem:[%s206 + $0x1d8] sm:$0xff]
        %v385 = vld [vmem:[%s206 + $0x1e0] sm:$0xff]
        %v386 = vld [vmem:[%s206 + $0x1e8] sm:$0xff]
        %v387 = vld [vmem:[%s206 + $0x1f0] sm:$0xff]
        %v388 = vld [vmem:[%s206 + $0x1f8] sm:$0xff]
        %v389 = vld [vmem:[%s206 + $0x200] sm:$0xff]
        %v390 = vld [vmem:[%s206 + $0x208] sm:$0xff]
        %v391 = vld [vmem:[%s206 + $0x210] sm:$0xff]
        %v392 = vld [vmem:[%s206 + $0x218] sm:$0xff]
        %v393 = vld [vmem:[%s206 + $0x220] sm:$0xff]
        %v394 = vld [vmem:[%s206 + $0x228] sm:$0xff]
        %v395 = vld [vmem:[%s206 + $0x230] sm:$0xff]
        %v396 = vld [vmem:[%s206 + $0x238] sm:$0xff]
        %v397 = vsub.f32 %v253, %v325
        %v398 = vsub.f32 %v254, %v326
        %v399 = vsub.f32 %v255, %v327
        %v400 = vsub.f32 %v256, %v328
        %v401 = vsub.f32 %v257, %v329
        %v402 = vsub.f32 %v258, %v330
        %v403 = vsub.f32 %v259, %v331
        %v404 = vsub.f32 %v260, %v332
        %v405 = vsub.f32 %v261, %v333
        %v406 = vsub.f32 %v262, %v334
        %v407 = vsub.f32 %v263, %v335
        %v408 = vsub.f32 %v264, %v336
        %v409 = vsub.f32 %v265, %v337
        %v410 = vsub.f32 %v266, %v338
        %v411 = vsub.f32 %v267, %v339
        %v412 = vsub.f32 %v268, %v340
        %v413 = vsub.f32 %v269, %v341
        %v414 = vsub.f32 %v270, %v342
        %v415 = vsub.f32 %v271, %v343
        %v416 = vsub.f32 %v272, %v344
        %v417 = vsub.f32 %v273, %v345
        %v418 = vsub.f32 %v274, %v346
        %v419 = vsub.f32 %v275, %v347
        %v420 = vsub.f32 %v276, %v348
        %v421 = vsub.f32 %v277, %v349
        %v422 = vsub.f32 %v278, %v350
        %v423 = vsub.f32 %v279, %v351
        %v424 = vsub.f32 %v280, %v352
        %v425 = vsub.f32 %v281, %v353
        %v426 = vsub.f32 %v282, %v354
        %v427 = vsub.f32 %v283, %v355
        %v428 = vsub.f32 %v284, %v356
        %v429 = vsub.f32 %v285, %v357
        %v430 = vsub.f32 %v286, %v358
        %v431 = vsub.f32 %v287, %v359
        %v432 = vsub.f32 %v288, %v360
        %v433 = vsub.f32 %v289, %v361
        %v434 = vsub.f32 %v290, %v362
        %v435 = vsub.f32 %v291, %v363
        %v436 = vsub.f32 %v292, %v364
        %v437 = vsub.f32 %v293, %v365
        %v438 = vsub.f32 %v294, %v366
        %v439 = vsub.f32 %v295, %v367
        %v440 = vsub.f32 %v296, %v368
        %v441 = vsub.f32 %v297, %v369
        %v442 = vsub.f32 %v298, %v370
        %v443 = vsub.f32 %v299, %v371
        %v444 = vsub.f32 %v300, %v372
        %v445 = vsub.f32 %v301, %v373
        %v446 = vsub.f32 %v302, %v374
        %v447 = vsub.f32 %v303, %v375
        %v448 = vsub.f32 %v304, %v376
        %v449 = vsub.f32 %v305, %v377
        %v450 = vsub.f32 %v306, %v378
        %v451 = vsub.f32 %v307, %v379
        %v452 = vsub.f32 %v308, %v380
        %v453 = vsub.f32 %v309, %v381
        %v454 = vsub.f32 %v310, %v382
        %v455 = vsub.f32 %v311, %v383
        %v456 = vsub.f32 %v312, %v384
        %v457 = vsub.f32 %v313, %v385
        %v458 = vsub.f32 %v314, %v386
        %v459 = vsub.f32 %v315, %v387
        %v460 = vsub.f32 %v316, %v388
        %v461 = vsub.f32 %v317, %v389
        %v462 = vsub.f32 %v318, %v390
        %v463 = vsub.f32 %v319, %v391
        %v464 = vsub.f32 %v320, %v392
        %v465 = vsub.f32 %v321, %v393
        %v466 = vsub.f32 %v322, %v394
        %v467 = vsub.f32 %v323, %v395
        %v468 = vsub.f32 %v324, %v396
        %v469 = vld [vmem:[%s231] sm:$0xff]
        %v470 = vld [vmem:[%s231 + $0x8] sm:$0xff]
        %v471 = vld [vmem:[%s231 + $0x10] sm:$0xff]
        %v472 = vld [vmem:[%s231 + $0x18] sm:$0xff]
        %v473 = vld [vmem:[%s231 + $0x20] sm:$0xff]
        %v474 = vld [vmem:[%s231 + $0x28] sm:$0xff]
        %v475 = vld [vmem:[%s231 + $0x30] sm:$0xff]
        %v476 = vld [vmem:[%s231 + $0x38] sm:$0xff]
        %v477 = vmul.f32 %v397, %v397
        %v478 = vmul.f32 %v398, %v398
        %v479 = vmul.f32 %v399, %v399
        %v480 = vmul.f32 %v400, %v400
        %v481 = vmul.f32 %v401, %v401
        %v482 = vmul.f32 %v402, %v402
        %v483 = vmul.f32 %v403, %v403
        %v484 = vmul.f32 %v404, %v404
        %v485 = vmul.f32 %v405, %v405
        %v486 = vmul.f32 %v406, %v406
        %v487 = vmul.f32 %v407, %v407
        %v488 = vmul.f32 %v408, %v408
        %v489 = vmul.f32 %v409, %v409
        %v490 = vmul.f32 %v410, %v410
        %v491 = vmul.f32 %v411, %v411
        %v492 = vmul.f32 %v412, %v412
        %v493 = vmul.f32 %v413, %v413
        %v494 = vmul.f32 %v414, %v414
        %v495 = vmul.f32 %v415, %v415
        %v496 = vmul.f32 %v416, %v416
        %v497 = vmul.f32 %v417, %v417
        %v498 = vmul.f32 %v418, %v418
        %v499 = vmul.f32 %v419, %v419
        %v500 = vmul.f32 %v420, %v420
        %v501 = vmul.f32 %v421, %v421
        %v502 = vmul.f32 %v422, %v422
        %v503 = vmul.f32 %v423, %v423
        %v504 = vmul.f32 %v424, %v424
        %v505 = vmul.f32 %v425, %v425
        %v506 = vmul.f32 %v426, %v426
        %v507 = vmul.f32 %v427, %v427
        %v508 = vmul.f32 %v428, %v428
        %v509 = vmul.f32 %v429, %v429
        %v510 = vmul.f32 %v430, %v430
        %v511 = vmul.f32 %v431, %v431
        %v512 = vmul.f32 %v432, %v432
        %v513 = vmul.f32 %v433, %v433
        %v514 = vmul.f32 %v434, %v434
        %v515 = vmul.f32 %v435, %v435
        %v516 = vmul.f32 %v436, %v436
        %v517 = vmul.f32 %v437, %v437
        %v518 = vmul.f32 %v438, %v438
        %v519 = vmul.f32 %v439, %v439
        %v520 = vmul.f32 %v440, %v440
        %v521 = vmul.f32 %v441, %v441
        %v522 = vmul.f32 %v442, %v442
        %v523 = vmul.f32 %v443, %v443
        %v524 = vmul.f32 %v444, %v444
        %v525 = vmul.f32 %v445, %v445
        %v526 = vmul.f32 %v446, %v446
        %v527 = vmul.f32 %v447, %v447
        %v528 = vmul.f32 %v448, %v448
        %v529 = vmul.f32 %v449, %v449
        %v530 = vmul.f32 %v450, %v450
        %v531 = vmul.f32 %v451, %v451
        %v532 = vmul.f32 %v452, %v452
        %v533 = vmul.f32 %v453, %v453
        %v534 = vmul.f32 %v454, %v454
        %v535 = vmul.f32 %v455, %v455
        %v536 = vmul.f32 %v456, %v456
        %v537 = vmul.f32 %v457, %v457
        %v538 = vmul.f32 %v458, %v458
        %v539 = vmul.f32 %v459, %v459
        %v540 = vmul.f32 %v460, %v460
        %v541 = vmul.f32 %v461, %v461
        %v542 = vmul.f32 %v462, %v462
        %v543 = vmul.f32 %v463, %v463
        %v544 = vmul.f32 %v464, %v464
        %v545 = vmul.f32 %v465, %v465
        %v546 = vmul.f32 %v466, %v466
        %v547 = vmul.f32 %v467, %v467
        %v548 = vmul.f32 %v468, %v468
        %v549 = vadd.f32 %v477, %v485
        %v550 = vadd.f32 %v549, %v493
        %v551 = vadd.f32 %v550, %v501
        %v552 = vadd.f32 %v551, %v509
        %v553 = vadd.f32 %v552, %v517
        %v554 = vadd.f32 %v553, %v525
        %v555 = vadd.f32 %v554, %v533
        %v556 = vadd.f32 %v555, %v541
        %v557 = vadd.f32 %v478, %v486
        %v558 = vadd.f32 %v557, %v494
        %v559 = vadd.f32 %v558, %v502
        %v560 = vadd.f32 %v559, %v510
        %v561 = vadd.f32 %v560, %v518
        %v562 = vadd.f32 %v561, %v526
        %v563 = vadd.f32 %v562, %v534
        %v564 = vadd.f32 %v563, %v542
        %v565 = vadd.f32 %v479, %v487
        %v566 = vadd.f32 %v565, %v495
        %v567 = vadd.f32 %v566, %v503
        %v568 = vadd.f32 %v567, %v511
        %v569 = vadd.f32 %v568, %v519
        %v570 = vadd.f32 %v569, %v527
        %v571 = vadd.f32 %v570, %v535
        %v572 = vadd.f32 %v571, %v543
        %v573 = vadd.f32 %v480, %v488
        %v574 = vadd.f32 %v573, %v496
        %v575 = vadd.f32 %v574, %v504
        %v576 = vadd.f32 %v575, %v512
        %v577 = vadd.f32 %v576, %v520
        %v578 = vadd.f32 %v577, %v528
        %v579 = vadd.f32 %v578, %v536
        %v580 = vadd.f32 %v579, %v544
        %v581 = vadd.f32 %v481, %v489
        %v582 = vadd.f32 %v581, %v497
        %v583 = vadd.f32 %v582, %v505
        %v584 = vadd.f32 %v583, %v513
        %v585 = vadd.f32 %v584, %v521
        %v586 = vadd.f32 %v585, %v529
        %v587 = vadd.f32 %v586, %v537
        %v588 = vadd.f32 %v587, %v545
        %v589 = vadd.f32 %v482, %v490
        %v590 = vadd.f32 %v589, %v498
        %v591 = vadd.f32 %v590, %v506
        %v592 = vadd.f32 %v591, %v514
        %v593 = vadd.f32 %v592, %v522
        %v594 = vadd.f32 %v593, %v530
        %v595 = vadd.f32 %v594, %v538
        %v596 = vadd.f32 %v595, %v546
        %v597 = vadd.f32 %v483, %v491
        %v598 = vadd.f32 %v597, %v499
        %v599 = vadd.f32 %v598, %v507
        %v600 = vadd.f32 %v599, %v515
        %v601 = vadd.f32 %v600, %v523
        %v602 = vadd.f32 %v601, %v531
        %v603 = vadd.f32 %v602, %v539
        %v604 = vadd.f32 %v603, %v547
        %v605 = vadd.f32 %v484, %v492
        %v606 = vadd.f32 %v605, %v500
        %v607 = vadd.f32 %v606, %v508
        %v608 = vadd.f32 %v607, %v516
        %v609 = vadd.f32 %v608, %v524
        %v610 = vadd.f32 %v609, %v532
        %v611 = vadd.f32 %v610, %v540
        %v612 = vadd.f32 %v611, %v548
        %v613 = vadd.f32 %v469, %v556
        %v614 = vadd.f32 %v470, %v564
        %v615 = vadd.f32 %v471, %v572
        %v616 = vadd.f32 %v472, %v580
        %v617 = vadd.f32 %v473, %v588
        %v618 = vadd.f32 %v474, %v596
        %v619 = vadd.f32 %v475, %v604
        %v620 = vadd.f32 %v476, %v612
        %621 = vst [vmem:[%s231] sm:$0xff] %v613
        %622 = vst [vmem:[%s231 + $0x8] sm:$0xff] %v614
        %623 = vst [vmem:[%s231 + $0x10] sm:$0xff] %v615
        %624 = vst [vmem:[%s231 + $0x18] sm:$0xff] %v616
        %625 = vst [vmem:[%s231 + $0x20] sm:$0xff] %v617
        %626 = vst [vmem:[%s231 + $0x28] sm:$0xff] %v618
        %627 = vst [vmem:[%s231 + $0x30] sm:$0xff] %v619
        %628 = vst [vmem:[%s231 + $0x38] sm:$0xff] %v620
        %s629 = sand.u32 %s106, 1
        %s630 = scalar_lea.sflag [#allocation4], %s629
        %s631 = sand.u32 %s106, 1
        %s632 = smul.addr %s631, 64
        %s633 = scalar_lea.vmem [#allocation7], %s632
        // Predicated region
        $region41: #{tpu_custom_call.1} parent=27 // pred_check
          %p634 = pneg %p116
        $region42: #{tpu_custom_call.1} parent=27 // pred_check_branch
          %636 = sbr.rel (%p634) target = $region44
        $region43: #{tpu_custom_call.1} parent=27 // pred_region
          %s637 = smul.u32 8, %s26
          %s639 = ssub.s32 1024, 1024
          %640 = vsyncadd %s630, %s639
          %s641 = smul.addr %s637, 128
          %s642 = scalar_lea.hbm %s2, %s641
          %s643 = sshll.u32 %s633, 4
          %s644 = int_to_ptr.vmem [resolvable:$true] %s643
          %649 = dma.vmem_to_hbm [thread:$0]  %s644, 1024, %s642, %s630, 128, 128, 8
        $region44: #{tpu_custom_call.1} parent=27 // pred_fallthru
          _
      $region28: #{tpu_custom_call.1} parent=5 // pred_fallthru
        _
      %p650 = scmp.le.s32.totalorder 2, %s17
      // Predicated region
      $region45: #{tpu_custom_call.1} parent=5 // pred_check
        %p651 = pneg %p650
      $region46: #{tpu_custom_call.1} parent=5 // pred_check_branch
        %653 = sbr.rel (%p651) target = $region48
      $region47: #{tpu_custom_call.1} parent=5 // pred_region
        %s654 = ssub.s32 %s17, 2
        // Predicated region
        $region49: #{tpu_custom_call.1} parent=47 // pred_check
          %p655 = pneg %p122
        $region50: #{tpu_custom_call.1} parent=47 // pred_check_branch
          %657 = sbr.rel (%p655) target = $region52
        $region51: #{tpu_custom_call.1} parent=47 // pred_region
          %s658 = sand.u32 %s107, 1
          %s659 = scalar_lea.sflag [#allocation4], %s658
          %s660 = sand.u32 %s107, 1
          %s661 = smul.addr %s660, 64
          %s662 = scalar_lea.vmem [#allocation7], %s661
          %663 = dma.done %s659, 1024
        $region52: #{tpu_custom_call.1} parent=47 // pred_fallthru
          _
      $region48: #{tpu_custom_call.1} parent=5 // pred_fallthru
        _
    $region6: #{tpu_custom_call.1} parent=1 // loop_footer
      %s21 = sadd.s32 1, %s17
    $region7: #{tpu_custom_call.1} parent=1 // loop_footer_branch
      %16 = sbr.rel target = $region3
    $region8: #{tpu_custom_call.1} parent=1 // loop_exit
      _
    %664 = vsyncpa [#allocation3], 1
    %s665 = scalar_lea.sflag [#allocation3], 1
    %666 = vsyncpa %s665, 1
    %667 = vsyncpa [#allocation6], 1
    %s668 = scalar_lea.sflag [#allocation6], 1
    %669 = vsyncpa %s668, 1
    %670 = vsyncpa [#allocation4], 1
    %s671 = scalar_lea.sflag [#allocation4], 1
    %672 = vsyncpa %s671, 1

</llo_original>
